<compile_context>
chip_gen: v7x
topology: tpu7x:2x2x1
jax: 0.10.0
libtpu: 0.0.40
codegen_flags: <defaults>
</compile_context>

<pallas_src>
import functools

import jax
import jax.numpy as jnp
from jax.experimental import pallas as pl
from jax.experimental.pallas import tpu as pltpu

EPS = 1e-12
LANES = 128
SUBLANES = 8


def _tree_partial_sum(err):
    """Reduce (tile_rows, 128) -> (8, 128) with a balanced tree of VPU adds.

    Slices are taken at 8-row (vreg) boundaries, so this is pure vreg adds:
    no cross-lane / cross-sublane (XLU) work and no reshapes.
    """
    parts = [err[k * SUBLANES:(k + 1) * SUBLANES, :]
             for k in range(err.shape[0] // SUBLANES)]
    while len(parts) > 1:
        nxt = [parts[k] + parts[k + 1] for k in range(0, len(parts) - 1, 2)]
        if len(parts) % 2:
            nxt.append(parts[-1])
        parts = nxt
    return parts[0]


def _charbonnier_sum_kernel(x_ref, y_ref, out_ref, *, tiles_per_core,
                            valid_rows_last):
    c = pl.program_id(0)   # core-split axis ("parallel")
    i = pl.program_id(1)   # row-tile reduction axis ("arbitrary")

    @pl.when(i == 0)
    def _():
        out_ref[...] = jnp.zeros_like(out_ref)

    x = x_ref[...].astype(jnp.float32)
    y = y_ref[...].astype(jnp.float32)
    diff = x - y
    err = jnp.sqrt(diff * diff + jnp.float32(EPS))

    def _accumulate(e):
        out_ref[...] += _tree_partial_sum(e)

    if valid_rows_last is None:
        # Every tile is full: zero mask work anywhere.
        _accumulate(err)
    else:
        # Only the globally-last tile is ragged; mask it there and only there.
        is_last = jnp.logical_and(c == pl.num_programs(0) - 1,
                                  i == tiles_per_core - 1)

        @pl.when(jnp.logical_not(is_last))
        def _():
            _accumulate(err)

        @pl.when(is_last)
        def _():
            row = jax.lax.broadcasted_iota(jnp.int32, err.shape, 0)
            _accumulate(jnp.where(row < valid_rows_last, err,
                                  jnp.float32(0.0)))


def l1_charbonnier_loss(x, y, *, max_tile_rows=2048):
    """mean(sqrt((x - y)^2 + 1e-12)) via a Pallas TPU reduction kernel."""
    assert x.shape == y.shape, (x.shape, y.shape)
    assert max_tile_rows % SUBLANES == 0
    n = int(x.size)

    xf = jnp.ravel(x)   # reshape only: no HBM copy
    yf = jnp.ravel(y)

    # Pad the flat length to a multiple of 8*128 only when necessary (the only
    # path that copies the inputs).  Each padded zero contributes exactly
    # sqrt(eps); that constant is subtracted from the final sum.
    flat_pad = (-n) % (SUBLANES * LANES)
    if flat_pad:
        xf = jnp.pad(xf, (0, flat_pad))
        yf = jnp.pad(yf, (0, flat_pad))

    rows = (n + flat_pad) // LANES          # multiple of 8
    x2 = xf.reshape(rows, LANES)
    y2 = yf.reshape(rows, LANES)

    tile_rows = min(rows, max_tile_rows)
    num_tiles = pl.cdiv(rows, tile_rows)

    # Shard the reduction across 2 TensorCores when the tile count splits
    # evenly (engages both cores on v7x; harmless serial loop on v5e/v6e).
    num_cores = 2 if num_tiles % 2 == 0 else 1
    tiles_per_core = num_tiles // num_cores

    valid_rows_last = rows - (num_tiles - 1) * tile_rows
    kernel = functools.partial(
        _charbonnier_sum_kernel,
        tiles_per_core=tiles_per_core,
        valid_rows_last=(None if valid_rows_last == tile_rows
                         else valid_rows_last),
    )

    partials = pl.pallas_call(
        kernel,
        out_shape=jax.ShapeDtypeStruct((num_cores * SUBLANES, LANES),
                                       jnp.float32),
        grid_spec=pltpu.PrefetchScalarGridSpec(
            num_scalar_prefetch=0,
            grid=(num_cores, tiles_per_core),
            in_specs=[
                pl.BlockSpec((tile_rows, LANES),
                             lambda c, i: (c * tiles_per_core + i, 0)),
                pl.BlockSpec((tile_rows, LANES),
                             lambda c, i: (c * tiles_per_core + i, 0)),
            ],
            out_specs=pl.BlockSpec((SUBLANES, LANES), lambda c, i: (c, 0)),
        ),
        compiler_params=pltpu.CompilerParams(
            dimension_semantics=("parallel", "arbitrary"),
            vmem_limit_bytes=32 * 1024 * 1024,
        ),
    )(x2, y2)

    total = jnp.sum(partials)                 # one tiny (8*cores,128) reduce
    if flat_pad:
        total = total - jnp.float32(flat_pad * (EPS ** 0.5))
    return total / jnp.float32(n)


if __name__ == "__main__":
    key = jax.random.PRNGKey(0)
    kx, ky = jax.random.split(key)

    # Small NCHW inputs matching the PyTorch module's typical usage.
    X = jax.random.normal(kx, (2, 4, 16, 16), dtype=jnp.float32)
    Y = jax.random.normal(ky, (2, 4, 16, 16), dtype=jnp.float32)

    loss = jax.block_until_ready(l1_charbonnier_loss(X, Y))

    diff = X - Y
    ref = jnp.mean(jnp.sqrt(diff * diff + EPS))
    assert jnp.allclose(loss, ref, rtol=1e-5, atol=1e-6), (loss, ref)

    # Also exercise the multi-tile / ragged-last-tile / 2-core code paths.
    kx2, ky2 = jax.random.split(jax.random.PRNGKey(1))
    X2 = jax.random.normal(kx2, (4, 8, 32, 32), dtype=jnp.float32)
    Y2 = jax.random.normal(ky2, (4, 8, 32, 32), dtype=jnp.float32)
    loss2 = jax.block_until_ready(
        l1_charbonnier_loss(X2, Y2, max_tile_rows=48))
    d2 = X2 - Y2
    ref2 = jnp.mean(jnp.sqrt(d2 * d2 + EPS))
    assert jnp.allclose(loss2, ref2, rtol=1e-5, atol=1e-6), (loss2, ref2)

    print("KERNEL_OK")
</pallas_src>

<mosaic_0001>
module attributes {stable_mosaic.version = 11 : i64} {
  func.func @_charbonnier_sum_kernel(%arg0: i32, %arg1: i32, %arg2: memref<16x128xf32, #tpu.memory_space<vmem>>, %arg3: memref<16x128xf32, #tpu.memory_space<vmem>>, %arg4: memref<8x128xf32, #tpu.memory_space<vmem>>) attributes {dimension_semantics = [#tpu.dimension_semantics<parallel>, #tpu.dimension_semantics<arbitrary>], iteration_bounds = array<i64: 1, 1>, scalar_prefetch = 0 : i64, scratch_operands = 0 : i64, tpu.core_type = #tpu.core_type<tc>, window_params = [{transform_indices = @transform_0, window_bounds = array<i64: 16, 128>}, {transform_indices = @transform_1, window_bounds = array<i64: 16, 128>}, {transform_indices = @transform_2, window_bounds = array<i64: 8, 128>}]} {
    %c0_i32 = arith.constant 0 : i32
    %0 = arith.cmpi eq, %arg1, %c0_i32 : i32
    %1 = arith.extui %0 : i1 to i32
    %c0_i32_0 = arith.constant 0 : i32
    %2 = arith.cmpi ne, %1, %c0_i32_0 : i32
    scf.if %2 {
      %cst_8 = arith.constant 0.000000e+00 : f32
      %16 = vector.broadcast %cst_8 : f32 to vector<8x128xf32>
      %c0_9 = arith.constant 0 : index
      %c0_10 = arith.constant 0 : index
      %17 = vector.load %arg4[%c0_9, %c0_10] : memref<8x128xf32, #tpu.memory_space<vmem>>, vector<8x128xf32>
      tpu.vector_store %arg4[%c0_9, %c0_10], %16 {strides = array<i32>} : memref<8x128xf32, #tpu.memory_space<vmem>>, vector<8x128xf32>,
    } else {
    }
    %c0 = arith.constant 0 : index
    %c0_1 = arith.constant 0 : index
    %3 = vector.load %arg2[%c0, %c0_1] : memref<16x128xf32, #tpu.memory_space<vmem>>, vector<16x128xf32>
    %c0_2 = arith.constant 0 : index
    %c0_3 = arith.constant 0 : index
    %4 = vector.load %arg3[%c0_2, %c0_3] : memref<16x128xf32, #tpu.memory_space<vmem>>, vector<16x128xf32>
    %5 = arith.subf %3, %4 : vector<16x128xf32>
    %6 = arith.mulf %5, %5 : vector<16x128xf32>
    %cst = arith.constant 9.99999996E-13 : f32
    %7 = vector.broadcast %cst : f32 to vector<16x128xf32>
    %8 = arith.addf %6, %7 : vector<16x128xf32>
    %9 = math.sqrt %8 : vector<16x128xf32>
    %c0_4 = arith.constant 0 : index
    %c0_5 = arith.constant 0 : index
    %10 = vector.load %arg4[%c0_4, %c0_5] : memref<8x128xf32, #tpu.memory_space<vmem>>, vector<8x128xf32>
    %11 = vector.extract_strided_slice %9 {offsets = [0, 0], sizes = [8, 128], strides = [1, 1]} : vector<16x128xf32> to vector<8x128xf32>
    %12 = vector.extract_strided_slice %9 {offsets = [8, 0], sizes = [8, 128], strides = [1, 1]} : vector<16x128xf32> to vector<8x128xf32>
    %13 = arith.addf %11, %12 : vector<8x128xf32>
    %14 = arith.addf %10, %13 : vector<8x128xf32>
    %c0_6 = arith.constant 0 : index
    %c0_7 = arith.constant 0 : index
    %15 = vector.load %arg4[%c0_6, %c0_7] : memref<8x128xf32, #tpu.memory_space<vmem>>, vector<8x128xf32>
    tpu.vector_store %arg4[%c0_6, %c0_7], %14 {strides = array<i32>} : memref<8x128xf32, #tpu.memory_space<vmem>>, vector<8x128xf32>,
    return
  }
  func.func @transform_0(%arg0: i32, %arg1: i32) -> (i32, i32) {
    %c1_i32 = arith.constant 1 : i32
    %0 = arith.muli %arg0, %c1_i32 : i32
    %1 = arith.addi %0, %arg1 : i32
    %c0_i32 = arith.constant 0 : i32
    %c0_i32_0 = arith.constant 0 : i32
    return %1, %c0_i32 : i32, i32
  }
  func.func @transform_1(%arg0: i32, %arg1: i32) -> (i32, i32) {
    %c1_i32 = arith.constant 1 : i32
    %0 = arith.muli %arg0, %c1_i32 : i32
    %1 = arith.addi %0, %arg1 : i32
    %c0_i32 = arith.constant 0 : i32
    %c0_i32_0 = arith.constant 0 : i32
    return %1, %c0_i32 : i32, i32
  }
  func.func @transform_2(%arg0: i32, %arg1: i32) -> (i32, i32) {
    %c0_i32 = arith.constant 0 : i32
    %c0_i32_0 = arith.constant 0 : i32
    return %arg0, %c0_i32 : i32, i32
  }
}

</mosaic_0001>

<llo_original>
// kernel: tpu_custom_call.1
$region0: #{tpu_custom_call.1}
  #allocation0 [shape = 'u32[]', space=smem, size = 0x4, offset = 0x4, fixed_abs, tag = 'smem constant byte address 0x4 - core index']
  #allocation1 [shape = 'u32[144,128]{1,0:T(1,128)}', space=vmem, size = 0x12000, scoped, tag = 'internal scratch']
  %s0 = inlined_call_operand.hbm [shape: f32[16,128], index: 0, kind: input, shape index: {}]
  %s1 = inlined_call_operand.hbm [shape: f32[16,128], index: 1, kind: input, shape index: {}]
  %s2 = inlined_call_operand.hbm [shape: f32[8,128], index: 2, kind: output, shape index: {}]
  %s3 = sld [smem:[#allocation0]]
  $region30: #{tpu_custom_call.1} parent=0
    _
  %s5 = ssub.s32 1, %s3
  %s6 = scalar_select 0, %s5, %s3
  $region1: #{tpu_custom_call.1} parent=0
    #allocation2 [shape = 'u8[8192]{0}', space=vmem, size = 0x2000, scoped, tag = 'input window, operand 0, single buffered']
    #allocation3 [shape = 's32[1]{0}', space=sflag, size = 0x4, scoped, tag = 'scoped memory for tpu_custom_call.1']
    #allocation4 [shape = 's32[1]{0}', space=sflag, size = 0x4, scoped, tag = 'scoped memory for tpu_custom_call.1']
    #allocation5 [shape = 'u8[8192]{0}', space=vmem, size = 0x2000, scoped, tag = 'input window, operand 1, single buffered']
    #allocation6 [shape = 's32[1]{0}', space=sflag, size = 0x4, scoped, tag = 'scoped memory for tpu_custom_call.1']
    #allocation7 [shape = 'u8[4096]{0}', space=vmem, size = 0x1000, scoped, tag = 'output window, operand 0, single buffered']
    %7 = vsyncpa [#allocation3], 0
    %8 = vsyncpa [#allocation6], 0
    %9 = vsyncpa [#allocation4], 0
    // Predicated region
    $region2: #{tpu_custom_call.1} parent=1 // pred_check
      _
    $region3: #{tpu_custom_call.1} parent=1 // pred_check_branch
      %11 = sbr.rel (0) target = $region5
    $region4: #{tpu_custom_call.1} parent=1 // pred_region
      %s12 = sadd.s32 0, 0
      %s13 = smul.u32 2, %s12
      %s15 = ssub.s32 256, 256
      %16 = vsyncadd [#allocation3], %s15
      %s17 = smul.addr %s13, 128
      %s18 = scalar_lea.hbm %s0, %s17
      %s19 = sshll.u32 [#allocation2], 4
      %s20 = int_to_ptr.vmem [resolvable:$true] %s19
      %25 = dma.hbm_to_vmem [thread:$0]  %s18, 256, %s20, [#allocation3], 128, 128, 8
    $region5: #{tpu_custom_call.1} parent=1 // pred_fallthru
      _
    // Predicated region
    $region6: #{tpu_custom_call.1} parent=1 // pred_check
      _
    $region7: #{tpu_custom_call.1} parent=1 // pred_check_branch
      %27 = sbr.rel (0) target = $region9
    $region8: #{tpu_custom_call.1} parent=1 // pred_region
      %s28 = sadd.s32 0, 0
      %s29 = smul.u32 2, %s28
      %s31 = ssub.s32 256, 256
      %32 = vsyncadd [#allocation6], %s31
      %s33 = smul.addr %s29, 128
      %s34 = scalar_lea.hbm %s1, %s33
      %s35 = sshll.u32 [#allocation5], 4
      %s36 = int_to_ptr.vmem [resolvable:$true] %s35
      %41 = dma.hbm_to_vmem [thread:$0]  %s34, 256, %s36, [#allocation6], 128, 128, 8
    $region9: #{tpu_custom_call.1} parent=1 // pred_fallthru
      _
    // Predicated region
    $region10: #{tpu_custom_call.1} parent=1 // pred_check
      _
    $region11: #{tpu_custom_call.1} parent=1 // pred_check_branch
      %43 = sbr.rel (0) target = $region13
    $region12: #{tpu_custom_call.1} parent=1 // pred_region
      %44 = dma.done [#allocation3], 256
    $region13: #{tpu_custom_call.1} parent=1 // pred_fallthru
      _
    // Predicated region
    $region14: #{tpu_custom_call.1} parent=1 // pred_check
      _
    $region15: #{tpu_custom_call.1} parent=1 // pred_check_branch
      %46 = sbr.rel (0) target = $region17
    $region16: #{tpu_custom_call.1} parent=1 // pred_region
      %47 = dma.done [#allocation6], 256
    $region17: #{tpu_custom_call.1} parent=1 // pred_fallthru
      _
    %s48 = sadd.s32 0, 0
    %s49 = smul.u32 2, %s48
    %s50 = sadd.s32 0, 0
    %s51 = smul.u32 2, %s50
    %p52 = scmp.eq.s32.totalorder 0, 0
    // Predicated region
    $region18: #{tpu_custom_call.1} parent=1 // pred_check
      %p53 = pneg %p52
    $region19: #{tpu_custom_call.1} parent=1 // pred_check_branch
      %55 = sbr.rel (%p53) target = $region21
    $region20: #{tpu_custom_call.1} parent=1 // pred_region
      %56 = vst [vmem:[#allocation7] sm:$0xff] 0.0
    $region21: #{tpu_custom_call.1} parent=1 // pred_fallthru
      _
    %v57 = vld [vmem:[#allocation2] sm:$0xff]
    %v58 = vld [vmem:[#allocation2 + $0x8] sm:$0xff]
    %v59 = vld [vmem:[#allocation5] sm:$0xff]
    %v60 = vld [vmem:[#allocation5 + $0x8] sm:$0xff]
    %v61 = vsub.f32 %v57, %v59
    %v62 = vsub.f32 %v58, %v60
    %v63 = vmul.f32 %v61, %v61
    %v64 = vmul.f32 %v62, %v62
    %v65 = vadd.f32 %v63, 1e-12
    %v66 = vadd.f32 %v64, 1e-12
    %v67 = vrsqrt.pop %v65
    %v68 = vmul.f32 %v65, %v67
    %vm69 = vcmp.eq.f32.partialorder %v65, inf
    %v70 = vsel %vm69, %v65, %v68
    %vm71 = vcmp.eq.f32.partialorder %v65, 0.0
    %v72 = vand.u32 %v65, 2147483648
    %v73 = vsel %vm71, %v72, %v70
    %v74 = vrsqrt.pop %v66
    %v75 = vmul.f32 %v66, %v74
    %vm76 = vcmp.eq.f32.partialorder %v66, inf
    %v77 = vsel %vm76, %v66, %v75
    %vm78 = vcmp.eq.f32.partialorder %v66, 0.0
    %v79 = vand.u32 %v66, 2147483648
    %v80 = vsel %vm78, %v79, %v77
    %v81 = vld [vmem:[#allocation7] sm:$0xff]
    %v82 = vadd.f32 %v73, %v80
    %v83 = vadd.f32 %v81, %v82
    %84 = vst [vmem:[#allocation7] sm:$0xff] %v83
    // Predicated region
    $region22: #{tpu_custom_call.1} parent=1 // pred_check
      _
    $region23: #{tpu_custom_call.1} parent=1 // pred_check_branch
      %86 = sbr.rel (0) target = $region25
    $region24: #{tpu_custom_call.1} parent=1 // pred_region
      %s88 = ssub.s32 128, 128
      %89 = vsyncadd [#allocation4], %s88
      %s91 = sshll.u32 [#allocation7], 4
      %s92 = int_to_ptr.vmem [resolvable:$true] %s91
      %94 = dma.vmem_to_hbm [thread:$0]  %s92, 128, %s2, [#allocation4]
    $region25: #{tpu_custom_call.1} parent=1 // pred_fallthru
      _
    // Predicated region
    $region26: #{tpu_custom_call.1} parent=1 // pred_check
      _
    $region27: #{tpu_custom_call.1} parent=1 // pred_check_branch
      %96 = sbr.rel (0) target = $region29
    $region28: #{tpu_custom_call.1} parent=1 // pred_region
      %97 = dma.done [#allocation4], 128
    $region29: #{tpu_custom_call.1} parent=1 // pred_fallthru
      _
    %98 = vsyncpa [#allocation3], 1
    %99 = vsyncpa [#allocation6], 1
    %100 = vsyncpa [#allocation4], 1

</llo_original>
